<compile_context>
chip_gen: v6e
topology: v6e:2x2x1
jax: 0.10.0
libtpu: 0.0.40
codegen_flags: <defaults>
</compile_context>

<pallas_src>
import functools

import jax
import jax.numpy as jnp
from jax import lax
from jax.experimental import pallas as pl
from jax.experimental.pallas import tpu as pltpu


LANE = 128
SUBLANE = 8


def _round_up(x: int, m: int) -> int:
    return ((x + m - 1) // m) * m


def _mlp_kernel(x_ref, w0_ref, wh_ref, wfc_ref, out_ref, hid_ref,
                *, num_layers: int, non_linear: bool, compute_dtype,
                unroll_layers: bool):
    """One batch tile of Network.forward, entirely in VMEM.

    x_ref   : [TB, Dp]        input activations (compute_dtype)
    w0_ref  : [Dp, Hp]        layer-0 weight (transposed, compute_dtype)
    wh_ref  : [Lh, Hp, Hp]    hidden-layer weights (transposed); Lh = max(L-1, 1)
    wfc_ref : [Hp, Op]        fc weight (transposed, compute_dtype)
    out_ref : [TB, Op]        fc output (f32)
    hid_ref : [L, TB, Hp]     per-layer activations (f32) -> the `out_list`
    """
    h = jnp.dot(x_ref[...], w0_ref[...], preferred_element_type=jnp.float32)
    if non_linear:
        h = jnp.maximum(h, 0.0)
    hid_ref[0] = h

    n_hidden = num_layers - 1
    if n_hidden > 0:
        if unroll_layers:
            # Small L: static unroll keeps everything scheduler-visible.
            for i in range(n_hidden):
                h = jnp.dot(h.astype(compute_dtype), wh_ref[i],
                            preferred_element_type=jnp.float32)
                if non_linear:
                    h = jnp.maximum(h, 0.0)
                hid_ref[i + 1] = h
        else:
            # Deep L: keep the hot loop small (bounded live ranges, 64 vregs).
            def body(i, h_carry):
                hn = jnp.dot(h_carry.astype(compute_dtype), wh_ref[i],
                             preferred_element_type=jnp.float32)
                if non_linear:
                    hn = jnp.maximum(hn, 0.0)
                hid_ref[i + 1] = hn
                return hn
            h = lax.fori_loop(0, n_hidden, body, h)

    out_ref[...] = jnp.dot(h.astype(compute_dtype), wfc_ref[...],
                           preferred_element_type=jnp.float32)


def network_forward(x, w0_t, wh_t, wfc_t, *, non_linear=False,
                    compute_dtype=jnp.bfloat16, batch_tile=256):
    """Fused MLP forward.

    x     : [B, D]  float32
    w0_t  : [D, H]  (PyTorch layer-0 weight, transposed)
    wh_t  : [L-1, H, H]
    wfc_t : [H, O]
    Returns (out [B, O] f32, [L activations, each [B, H] f32]).
    """
    B, D = x.shape
    H = w0_t.shape[1]
    O = wfc_t.shape[1]
    L = wh_t.shape[0] + 1
    Lh = max(L - 1, 1)  # dummy slice when L == 1 (never read)

    # --- lane-dense padding (exact: zero-padded bias-free linears) ---------
    Dp = _round_up(D, LANE)
    Hp = _round_up(H, LANE)
    Op = _round_up(O, LANE)
    TB = min(_round_up(B, SUBLANE), batch_tile)
    Bp = _round_up(B, TB)
    n_bt = Bp // TB

    x_p = jnp.zeros((Bp, Dp), compute_dtype).at[:B, :D].set(
        x.astype(compute_dtype))
    w0_p = jnp.zeros((Dp, Hp), compute_dtype).at[:D, :H].set(
        w0_t.astype(compute_dtype))
    wh_p = jnp.zeros((Lh, Hp, Hp), compute_dtype)
    if L > 1:
        wh_p = wh_p.at[:, :H, :H].set(wh_t.astype(compute_dtype))
    wfc_p = jnp.zeros((Hp, Op), compute_dtype).at[:H, :O].set(
        wfc_t.astype(compute_dtype))

    unroll_layers = (L - 1) <= 8
    kernel = functools.partial(
        _mlp_kernel, num_layers=L, non_linear=non_linear,
        compute_dtype=compute_dtype, unroll_layers=unroll_layers)

    # --- VMEM budget (double-buffered streams + resident weights) ----------
    cbytes = jnp.dtype(compute_dtype).itemsize
    needed = (
        2 * TB * Dp * cbytes                                   # x tiles
        + 2 * (Dp * Hp + Lh * Hp * Hp + Hp * Op) * cbytes      # weights (cons.)
        + 2 * (TB * Op * 4 + L * TB * Hp * 4)                  # out / hid tiles
        + (L + 1) * TB * Hp * 4                                # live f32 acts
    )
    vmem_limit = int(min(max(needed + (8 << 20), 16 << 20), 64 << 20))

    out_p, hid_p = pl.pallas_call(
        kernel,
        out_shape=(
            jax.ShapeDtypeStruct((Bp, Op), jnp.float32),
            jax.ShapeDtypeStruct((L, Bp, Hp), jnp.float32),
        ),
        grid_spec=pltpu.PrefetchScalarGridSpec(
            num_scalar_prefetch=0,
            grid=(n_bt,),
            in_specs=[
                pl.BlockSpec((TB, Dp), lambda i: (i, 0)),       # x: per batch tile
                pl.BlockSpec((Dp, Hp), lambda i: (0, 0)),       # w0: resident
                pl.BlockSpec((Lh, Hp, Hp), lambda i: (0, 0, 0)),  # wh: resident
                pl.BlockSpec((Hp, Op), lambda i: (0, 0)),       # wfc: resident
            ],
            out_specs=(
                pl.BlockSpec((TB, Op), lambda i: (i, 0)),       # fc output
                pl.BlockSpec((L, TB, Hp), lambda i: (0, i, 0)),  # activations
            ),
        ),
        compiler_params=pltpu.CompilerParams(
            dimension_semantics=("parallel",),   # batch tiles split across TCs
            vmem_limit_bytes=vmem_limit,
        ),
    )(x_p, w0_p, wh_p, wfc_p)

    out = out_p[:B, :O]
    hid = hid_p[:, :B, :H]
    out_list = [hid[i] for i in range(L)]
    return out, out_list


def init_params(key, input_dim, hidden_dim, output_dim, num_layers):
    """'default'-style init: U(-1/sqrt(fan_in), 1/sqrt(fan_in)), bias=False,
    matching torch.nn.Linear's default. Weights stored transposed ([in, out])."""
    keys = jax.random.split(key, num_layers + 1)

    def lin(k, fan_in, fan_out):
        bound = 1.0 / jnp.sqrt(jnp.float32(fan_in))
        w = jax.random.uniform(k, (fan_out, fan_in), jnp.float32, -bound, bound)
        return w.T

    w0_t = lin(keys[0], input_dim, hidden_dim)                      # [D, H]
    if num_layers > 1:
        wh_t = jnp.stack(
            [lin(keys[i], hidden_dim, hidden_dim) for i in range(1, num_layers)]
        )                                                           # [L-1, H, H]
    else:
        wh_t = jnp.zeros((0, hidden_dim, hidden_dim), jnp.float32)
    wfc_t = lin(keys[num_layers], hidden_dim, output_dim)           # [H, O]
    return w0_t, wh_t, wfc_t


def reference_forward(x, w0_t, wh_t, wfc_t, *, non_linear=False):
    h = x @ w0_t
    if non_linear:
        h = jnp.maximum(h, 0.0)
    outs = [h]
    for i in range(wh_t.shape[0]):
        h = h @ wh_t[i]
        if non_linear:
            h = jnp.maximum(h, 0.0)
        outs.append(h)
    return h @ wfc_t, outs


if __name__ == "__main__":
    # Small demo shapes consistent with the module: x is [batch, input_dim].
    # (At this size the kernel is pure overhead; the gridded/padded/bf16
    # structure is what matters at production B/H/L.)
    batch, input_dim, hidden_dim, output_dim, num_layers = 8, 16, 32, 8, 3

    key = jax.random.PRNGKey(0)
    k_x, k_w = jax.random.split(key)
    x = jax.random.normal(k_x, (batch, input_dim), jnp.float32)
    w0_t, wh_t, wfc_t = init_params(k_w, input_dim, hidden_dim, output_dim,
                                    num_layers)

    ref_out, ref_list = reference_forward(x, w0_t, wh_t, wfc_t,
                                          non_linear=False)
    ref_out_nl, ref_list_nl = reference_forward(x, w0_t, wh_t, wfc_t,
                                                non_linear=True)

    # --- f32 compute path: exact match with the reference -------------------
    out32, list32 = network_forward(x, w0_t, wh_t, wfc_t, non_linear=False,
                                    compute_dtype=jnp.float32)
    out32 = jax.block_until_ready(out32)
    assert out32.shape == (batch, output_dim)
    assert len(list32) == num_layers
    assert jnp.allclose(out32, ref_out, atol=1e-5, rtol=1e-5)
    for a, b in zip(list32, ref_list):
        assert a.shape == (batch, hidden_dim)
        assert jnp.allclose(a, b, atol=1e-5, rtol=1e-5)

    # --- f32, non_linear=True path ------------------------------------------
    out_nl, list_nl = network_forward(x, w0_t, wh_t, wfc_t, non_linear=True,
                                      compute_dtype=jnp.float32)
    out_nl = jax.block_until_ready(out_nl)
    assert jnp.allclose(out_nl, ref_out_nl, atol=1e-5, rtol=1e-5)
    for a, b in zip(list_nl, ref_list_nl):
        assert jnp.allclose(a, b, atol=1e-5, rtol=1e-5)

    # --- bf16 compute path (recommended for perf): loose check vs f32 ref ---
    outbf, listbf = network_forward(x, w0_t, wh_t, wfc_t, non_linear=False,
                                    compute_dtype=jnp.bfloat16)
    outbf = jax.block_until_ready(outbf)
    assert jnp.allclose(outbf, ref_out, atol=5e-2, rtol=5e-2)
    for a, b in zip(listbf, ref_list):
        assert jnp.allclose(a, b, atol=5e-2, rtol=5e-2)

    print("KERNEL_OK")
</pallas_src>

<mosaic_0001>
module attributes {stable_mosaic.version = 11 : i64} {
  func.func @_mlp_kernel(%arg0: i32, %arg1: memref<8x128xf32, #tpu.memory_space<vmem>>, %arg2: memref<128x128xf32, #tpu.memory_space<vmem>>, %arg3: memref<2x128x128xf32, #tpu.memory_space<vmem>>, %arg4: memref<128x128xf32, #tpu.memory_space<vmem>>, %arg5: memref<8x128xf32, #tpu.memory_space<vmem>>, %arg6: memref<3x8x128xf32, #tpu.memory_space<vmem>>) attributes {dimension_semantics = [#tpu.dimension_semantics<parallel>], iteration_bounds = array<i64: 1>, scalar_prefetch = 0 : i64, scratch_operands = 0 : i64, tpu.core_type = #tpu.core_type<tc>, window_params = [{transform_indices = @transform_0, window_bounds = array<i64: 8, 128>}, {pipeline_mode = #tpu.pipeline_mode<synchronous>, transform_indices = @transform_1, window_bounds = array<i64: 128, 128>}, {pipeline_mode = #tpu.pipeline_mode<synchronous>, transform_indices = @transform_2, window_bounds = array<i64: 2, 128, 128>}, {pipeline_mode = #tpu.pipeline_mode<synchronous>, transform_indices = @transform_3, window_bounds = array<i64: 128, 128>}, {transform_indices = @transform_4, window_bounds = array<i64: 8, 128>}, {transform_indices = @transform_5, window_bounds = array<i64: 3, 8, 128>}]} {
    %c0 = arith.constant 0 : index
    %c0_0 = arith.constant 0 : index
    %0 = vector.load %arg1[%c0, %c0_0] : memref<8x128xf32, #tpu.memory_space<vmem>>, vector<8x128xf32>
    %c0_1 = arith.constant 0 : index
    %c0_2 = arith.constant 0 : index
    %1 = vector.load %arg2[%c0_1, %c0_2] : memref<128x128xf32, #tpu.memory_space<vmem>>, vector<128x128xf32>
    %cst = arith.constant dense<0.000000e+00> : vector<8x128xf32>
    %2 = tpu.matmul %0, %1, %cst {dimension_numbers = #tpu.dot_dimension_numbers<[1], [0], [0], [1], [0, 0, 1, 1], [], []>} : vector<8x128xf32>, vector<128x128xf32>, vector<8x128xf32> -> vector<8x128xf32>
    %c0_3 = arith.constant 0 : index
    %c0_4 = arith.constant 0 : index
    %c0_5 = arith.constant 0 : index
    %3 = vector.load %arg6[%c0_3, %c0_4, %c0_5] : memref<3x8x128xf32, #tpu.memory_space<vmem>>, vector<1x8x128xf32>
    %4 = vector.shape_cast %3 : vector<1x8x128xf32> to vector<8x128xf32>
    %5 = vector.shape_cast %2 : vector<8x128xf32> to vector<1x8x128xf32>
    tpu.vector_store %arg6[%c0_3, %c0_4, %c0_5], %5 {strides = array<i32>} : memref<3x8x128xf32, #tpu.memory_space<vmem>>, vector<1x8x128xf32>,
    %c0_6 = arith.constant 0 : index
    %c0_7 = arith.constant 0 : index
    %c0_8 = arith.constant 0 : index
    %6 = vector.load %arg3[%c0_6, %c0_7, %c0_8] : memref<2x128x128xf32, #tpu.memory_space<vmem>>, vector<1x128x128xf32>
    %7 = vector.shape_cast %6 : vector<1x128x128xf32> to vector<128x128xf32>
    %cst_9 = arith.constant dense<0.000000e+00> : vector<8x128xf32>
    %8 = tpu.matmul %2, %7, %cst_9 {dimension_numbers = #tpu.dot_dimension_numbers<[1], [0], [0], [1], [0, 0, 1, 1], [], []>} : vector<8x128xf32>, vector<128x128xf32>, vector<8x128xf32> -> vector<8x128xf32>
    %c1 = arith.constant 1 : index
    %c0_10 = arith.constant 0 : index
    %c0_11 = arith.constant 0 : index
    %9 = vector.load %arg6[%c1, %c0_10, %c0_11] : memref<3x8x128xf32, #tpu.memory_space<vmem>>, vector<1x8x128xf32>
    %10 = vector.shape_cast %9 : vector<1x8x128xf32> to vector<8x128xf32>
    %11 = vector.shape_cast %8 : vector<8x128xf32> to vector<1x8x128xf32>
    tpu.vector_store %arg6[%c1, %c0_10, %c0_11], %11 {strides = array<i32>} : memref<3x8x128xf32, #tpu.memory_space<vmem>>, vector<1x8x128xf32>,
    %c1_12 = arith.constant 1 : index
    %c0_13 = arith.constant 0 : index
    %c0_14 = arith.constant 0 : index
    %12 = vector.load %arg3[%c1_12, %c0_13, %c0_14] : memref<2x128x128xf32, #tpu.memory_space<vmem>>, vector<1x128x128xf32>
    %13 = vector.shape_cast %12 : vector<1x128x128xf32> to vector<128x128xf32>
    %cst_15 = arith.constant dense<0.000000e+00> : vector<8x128xf32>
    %14 = tpu.matmul %8, %13, %cst_15 {dimension_numbers = #tpu.dot_dimension_numbers<[1], [0], [0], [1], [0, 0, 1, 1], [], []>} : vector<8x128xf32>, vector<128x128xf32>, vector<8x128xf32> -> vector<8x128xf32>
    %c2 = arith.constant 2 : index
    %c0_16 = arith.constant 0 : index
    %c0_17 = arith.constant 0 : index
    %15 = vector.load %arg6[%c2, %c0_16, %c0_17] : memref<3x8x128xf32, #tpu.memory_space<vmem>>, vector<1x8x128xf32>
    %16 = vector.shape_cast %15 : vector<1x8x128xf32> to vector<8x128xf32>
    %17 = vector.shape_cast %14 : vector<8x128xf32> to vector<1x8x128xf32>
    tpu.vector_store %arg6[%c2, %c0_16, %c0_17], %17 {strides = array<i32>} : memref<3x8x128xf32, #tpu.memory_space<vmem>>, vector<1x8x128xf32>,
    %c0_18 = arith.constant 0 : index
    %c0_19 = arith.constant 0 : index
    %18 = vector.load %arg4[%c0_18, %c0_19] : memref<128x128xf32, #tpu.memory_space<vmem>>, vector<128x128xf32>
    %cst_20 = arith.constant dense<0.000000e+00> : vector<8x128xf32>
    %19 = tpu.matmul %14, %18, %cst_20 {dimension_numbers = #tpu.dot_dimension_numbers<[1], [0], [0], [1], [0, 0, 1, 1], [], []>} : vector<8x128xf32>, vector<128x128xf32>, vector<8x128xf32> -> vector<8x128xf32>
    %c0_21 = arith.constant 0 : index
    %c0_22 = arith.constant 0 : index
    %20 = vector.load %arg5[%c0_21, %c0_22] : memref<8x128xf32, #tpu.memory_space<vmem>>, vector<8x128xf32>
    tpu.vector_store %arg5[%c0_21, %c0_22], %19 {strides = array<i32>} : memref<8x128xf32, #tpu.memory_space<vmem>>, vector<8x128xf32>,
    return
  }
  func.func @transform_0(%arg0: i32) -> (i32, i32) {
    %c0_i32 = arith.constant 0 : i32
    %c0_i32_0 = arith.constant 0 : i32
    return %arg0, %c0_i32 : i32, i32
  }
  func.func @transform_1(%arg0: i32) -> (i32, i32) {
    %c0_i32 = arith.constant 0 : i32
    %c0_i32_0 = arith.constant 0 : i32
    %c0_i32_1 = arith.constant 0 : i32
    return %c0_i32, %c0_i32_0 : i32, i32
  }
  func.func @transform_2(%arg0: i32) -> (i32, i32, i32) {
    %c0_i32 = arith.constant 0 : i32
    %c0_i32_0 = arith.constant 0 : i32
    %c0_i32_1 = arith.constant 0 : i32
    %c0_i32_2 = arith.constant 0 : i32
    return %c0_i32, %c0_i32_0, %c0_i32_1 : i32, i32, i32
  }
  func.func @transform_3(%arg0: i32) -> (i32, i32) {
    %c0_i32 = arith.constant 0 : i32
    %c0_i32_0 = arith.constant 0 : i32
    %c0_i32_1 = arith.constant 0 : i32
    return %c0_i32, %c0_i32_0 : i32, i32
  }
  func.func @transform_4(%arg0: i32) -> (i32, i32) {
    %c0_i32 = arith.constant 0 : i32
    %c0_i32_0 = arith.constant 0 : i32
    return %arg0, %c0_i32 : i32, i32
  }
  func.func @transform_5(%arg0: i32) -> (i32, i32, i32) {
    %c0_i32 = arith.constant 0 : i32
    %c0_i32_0 = arith.constant 0 : i32
    %c0_i32_1 = arith.constant 0 : i32
    return %c0_i32, %arg0, %c0_i32_0 : i32, i32, i32
  }
}

</mosaic_0001>

<llo_original>
// kernel: tpu_custom_call.1
$region0: #{tpu_custom_call.1}
  #allocation0 [shape = 'u32[]', space=smem, size = 0x4, offset = 0x4, fixed_abs, tag = 'smem constant byte address 0x4 - core index']
  #allocation1 [shape = 'u32[144,128]{1,0:T(1,128)}', space=vmem, size = 0x12000, scoped, tag = 'internal scratch']
  %s0 = inlined_call_operand.hbm [shape: f32[8,128], index: 0, kind: input, shape index: {}]
  %s1 = inlined_call_operand.hbm [shape: f32[128,128], index: 1, kind: input, shape index: {}]
  %s2 = inlined_call_operand.hbm [shape: f32[2,128,128], index: 2, kind: input, shape index: {}]
  %s3 = inlined_call_operand.hbm [shape: f32[128,128], index: 3, kind: input, shape index: {}]
  %s4 = inlined_call_operand.hbm [shape: f32[8,128], index: 4, kind: output, shape index: {0}]
  %s5 = inlined_call_operand.hbm [shape: f32[3,8,128], index: 5, kind: output, shape index: {1}]
  %6 = xla_tuple %s4, %s5
  %s7 = sld [smem:[#allocation0]]
  $region50: #{tpu_custom_call.1} parent=0
    _
  %s9 = ssub.s32 1, %s7
  %s10 = scalar_select 0, %s9, %s7
  $region1: #{tpu_custom_call.1} parent=0
    #allocation2 [shape = 'u8[4096]{0}', space=vmem, size = 0x1000, scoped, tag = 'input window, operand 0, single buffered']
    #allocation3 [shape = 's32[1]{0}', space=sflag, size = 0x4, scoped, tag = 'scoped memory for tpu_custom_call.1']
    #allocation4 [shape = 's32[1]{0}', space=sflag, size = 0x4, scoped, tag = 'scoped memory for tpu_custom_call.1']
    #allocation5 [shape = 'u8[65536]{0}', space=vmem, size = 0x10000, scoped, tag = 'input window, operand 1, single buffered']
    #allocation6 [shape = 's32[1]{0}', space=sflag, size = 0x4, scoped, tag = 'scoped memory for tpu_custom_call.1']
    #allocation7 [shape = 'u8[131072]{0}', space=vmem, size = 0x20000, scoped, tag = 'input window, operand 2, single buffered']
    #allocation8 [shape = 'u8[65536]{0}', space=vmem, size = 0x10000, scoped, tag = 'input window, operand 3, single buffered']
    #allocation9 [shape = 's32[1]{0}', space=sflag, size = 0x4, scoped, tag = 'scoped memory for tpu_custom_call.1']
    #allocation10 [shape = 'u8[4096]{0}', space=vmem, size = 0x1000, scoped, tag = 'output window, operand 0, single buffered']
    #allocation11 [shape = 'u8[12288]{0}', space=vmem, size = 0x3000, scoped, tag = 'output window, operand 1, single buffered']
    #allocation12 [shape = 's32[1]{0}', space=sflag, size = 0x4, scoped, tag = 'scoped memory for tpu_custom_call.1']
    %11 = vsyncpa [#allocation3], 0
    %12 = vsyncpa [#allocation6], 0
    %13 = vsyncpa [#allocation9], 0
    %14 = vsyncpa [#allocation4], 0
    %15 = vsyncpa [#allocation12], 0
    // Predicated region
    $region2: #{tpu_custom_call.1} parent=1 // pred_check
      _
    $region3: #{tpu_custom_call.1} parent=1 // pred_check_branch
      %17 = sbr.rel (0) target = $region5
    $region4: #{tpu_custom_call.1} parent=1 // pred_region
      %s19 = ssub.s32 128, 128
      %20 = vsyncadd [#allocation3], %s19
      %s22 = sshll.u32 [#allocation2], 4
      %s23 = int_to_ptr.vmem [resolvable:$true] %s22
      %25 = dma.hbm_to_vmem [thread:$0]  %s0, 128, %s23, [#allocation3]
    $region5: #{tpu_custom_call.1} parent=1 // pred_fallthru
      _
    // Predicated region
    $region6: #{tpu_custom_call.1} parent=1 // pred_check
      _
    $region7: #{tpu_custom_call.1} parent=1 // pred_check_branch
      %27 = sbr.rel (0) target = $region9
    $region8: #{tpu_custom_call.1} parent=1 // pred_region
      %s29 = ssub.s32 2048, 2048
      %30 = vsyncadd [#allocation6], %s29
      %s31 = sshll.u32 [#allocation5], 4
      %s32 = int_to_ptr.vmem [resolvable:$true] %s31
      %37 = dma.hbm_to_vmem [thread:$0]  %s1, 2048, %s32, [#allocation6], 128, 128, 8
    $region9: #{tpu_custom_call.1} parent=1 // pred_fallthru
      _
    // Predicated region
    $region10: #{tpu_custom_call.1} parent=1 // pred_check
      _
    $region11: #{tpu_custom_call.1} parent=1 // pred_check_branch
      %39 = sbr.rel (0) target = $region13
    $region12: #{tpu_custom_call.1} parent=1 // pred_region
      %s41 = ssub.s32 4096, 4096
      %42 = vsyncadd [#allocation6], %s41
      %s43 = sshll.u32 [#allocation7], 4
      %s44 = int_to_ptr.vmem [resolvable:$true] %s43
      %49 = dma.hbm_to_vmem [thread:$0]  %s2, 4096, %s44, [#allocation6], 128, 128, 8
    $region13: #{tpu_custom_call.1} parent=1 // pred_fallthru
      _
    // Predicated region
    $region14: #{tpu_custom_call.1} parent=1 // pred_check
      _
    $region15: #{tpu_custom_call.1} parent=1 // pred_check_branch
      %51 = sbr.rel (0) target = $region17
    $region16: #{tpu_custom_call.1} parent=1 // pred_region
      %s53 = ssub.s32 2048, 2048
      %54 = vsyncadd [#allocation9], %s53
      %s55 = sshll.u32 [#allocation8], 4
      %s56 = int_to_ptr.vmem [resolvable:$true] %s55
      %61 = dma.hbm_to_vmem [thread:$0]  %s3, 2048, %s56, [#allocation9], 128, 128, 8
    $region17: #{tpu_custom_call.1} parent=1 // pred_fallthru
      _
    // Predicated region
    $region18: #{tpu_custom_call.1} parent=1 // pred_check
      _
    $region19: #{tpu_custom_call.1} parent=1 // pred_check_branch
      %63 = sbr.rel (0) target = $region21
    $region20: #{tpu_custom_call.1} parent=1 // pred_region
      %64 = dma.done [#allocation3], 128
    $region21: #{tpu_custom_call.1} parent=1 // pred_fallthru
      _
    // Predicated region
    $region22: #{tpu_custom_call.1} parent=1 // pred_check
      _
    $region23: #{tpu_custom_call.1} parent=1 // pred_check_branch
      %66 = sbr.rel (0) target = $region25
    $region24: #{tpu_custom_call.1} parent=1 // pred_region
      %67 = dma.done [#allocation6], 2048
    $region25: #{tpu_custom_call.1} parent=1 // pred_fallthru
      _
    // Predicated region
    $region26: #{tpu_custom_call.1} parent=1 // pred_check
      _
    $region27: #{tpu_custom_call.1} parent=1 // pred_check_branch
      %69 = sbr.rel (0) target = $region29
    $region28: #{tpu_custom_call.1} parent=1 // pred_region
      %70 = dma.done [#allocation6], 4096
    $region29: #{tpu_custom_call.1} parent=1 // pred_fallthru
      _
    // Predicated region
    $region30: #{tpu_custom_call.1} parent=1 // pred_check
      _
    $region31: #{tpu_custom_call.1} parent=1 // pred_check_branch
      %72 = sbr.rel (0) target = $region33
    $region32: #{tpu_custom_call.1} parent=1 // pred_region
      %73 = dma.done [#allocation9], 2048
    $region33: #{tpu_custom_call.1} parent=1 // pred_fallthru
      _
    %v74 = vld [vmem:[#allocation2] sm:$0xff]
    %v75 = vld [vmem:[#allocation5] sm:$0xff]
    %v76 = vld [vmem:[#allocation5 + $0x8] sm:$0xff]
    %v77 = vld [vmem:[#allocation5 + $0x10] sm:$0xff]
    %v78 = vld [vmem:[#allocation5 + $0x18] sm:$0xff]
    %v79 = vld [vmem:[#allocation5 + $0x20] sm:$0xff]
    %v80 = vld [vmem:[#allocation5 + $0x28] sm:$0xff]
    %v81 = vld [vmem:[#allocation5 + $0x30] sm:$0xff]
    %v82 = vld [vmem:[#allocation5 + $0x38] sm:$0xff]
    %v83 = vld [vmem:[#allocation5 + $0x40] sm:$0xff]
    %v84 = vld [vmem:[#allocation5 + $0x48] sm:$0xff]
    %v85 = vld [vmem:[#allocation5 + $0x50] sm:$0xff]
    %v86 = vld [vmem:[#allocation5 + $0x58] sm:$0xff]
    %v87 = vld [vmem:[#allocation5 + $0x60] sm:$0xff]
    %v88 = vld [vmem:[#allocation5 + $0x68] sm:$0xff]
    %v89 = vld [vmem:[#allocation5 + $0x70] sm:$0xff]
    %v90 = vld [vmem:[#allocation5 + $0x78] sm:$0xff]
    %91 = vmatprep.subr.mxu0 0.0
    %92 = vmatpush1.msra.mxu0 %v90
    %93 = vmatprep.subr.mxu0 0.0
    %94 = vmatpush1.msra.mxu0 %v89
    %95 = vmatprep.subr.mxu0 0.0
    %96 = vmatpush1.msra.mxu0 %v88
    %97 = vmatprep.subr.mxu0 0.0
    %98 = vmatpush1.msra.mxu0 %v87
    %99 = vmatprep.subr.mxu0 0.0
    %100 = vmatpush1.msra.mxu0 %v86
    %101 = vmatprep.subr.mxu0 0.0
    %102 = vmatpush1.msra.mxu0 %v85
    %103 = vmatprep.subr.mxu0 0.0
    %104 = vmatpush1.msra.mxu0 %v84
    %105 = vmatprep.subr.mxu0 0.0
    %106 = vmatpush1.msra.mxu0 %v83
    %107 = vmatprep.subr.mxu0 0.0
    %108 = vmatpush1.msra.mxu0 %v82
    %109 = vmatprep.subr.mxu0 0.0
    %110 = vmatpush1.msra.mxu0 %v81
    %111 = vmatprep.subr.mxu0 0.0
    %112 = vmatpush1.msra.mxu0 %v80
    %113 = vmatprep.subr.mxu0 0.0
    %114 = vmatpush1.msra.mxu0 %v79
    %115 = vmatprep.subr.mxu0 0.0
    %116 = vmatpush1.msra.mxu0 %v78
    %117 = vmatprep.subr.mxu0 0.0
    %118 = vmatpush1.msra.mxu0 %v77
    %119 = vmatprep.subr.mxu0 0.0
    %120 = vmatpush1.msra.mxu0 %v76
    %121 = vmatprep.subr.mxu0 0.0
    %122 = vmatpush1.msra.mxu0 %v75
    %123 = vmatprep.subr.mxu0 0.0
    %124 = vmatpush2.msra.mxu0 0.0
    %125 = vmatprep.subr.mxu0 0.0
    %126 = vmatpush2.msra.mxu0 0.0
    %127 = vmatprep.subr.mxu0 0.0
    %128 = vmatpush2.msra.mxu0 0.0
    %129 = vmatprep.subr.mxu0 0.0
    %130 = vmatpush2.msra.mxu0 0.0
    %131 = vmatprep.subr.mxu0 0.0
    %132 = vmatpush2.msra.mxu0 0.0
    %133 = vmatprep.subr.mxu0 0.0
    %134 = vmatpush2.msra.mxu0 0.0
    %135 = vmatprep.subr.mxu0 0.0
    %136 = vmatpush2.msra.mxu0 0.0
    %137 = vmatprep.subr.mxu0 0.0
    %138 = vmatpush2.msra.mxu0 0.0
    %139 = vmatprep.subr.mxu0 0.0
    %140 = vmatpush2.msra.mxu0 0.0
    %141 = vmatprep.subr.mxu0 0.0
    %142 = vmatpush2.msra.mxu0 0.0
    %143 = vmatprep.subr.mxu0 0.0
    %144 = vmatpush2.msra.mxu0 0.0
    %145 = vmatprep.subr.mxu0 0.0
    %146 = vmatpush2.msra.mxu0 0.0
    %147 = vmatprep.subr.mxu0 0.0
    %148 = vmatpush2.msra.mxu0 0.0
    %149 = vmatprep.subr.mxu0 0.0
    %150 = vmatpush2.msra.mxu0 0.0
    %151 = vmatprep.subr.mxu0 0.0
    %152 = vmatpush2.msra.mxu0 0.0
    %153 = vmatprep.subr.mxu0 0.0
    %154 = vmatpush2.msra.mxu0 0.0
    %155 = vmatprep.mubr.f32.mxu0 0.0
    %156 = vmatmul.mubr.f32.gmra.mxu0 %v74
    %v157 = vpop.f32.mrf.mxu0
    %v158 = vadd.f32 0.0, %v157
    %v159 = vpop.f32.mrf.mxu0
    %160 = vdwg.mxu0
    %161 = vst [vmem:[#allocation11] sm:$0xff] %v158
    %v162 = vld [vmem:[#allocation7] sm:$0xff]
    %v163 = vld [vmem:[#allocation7 + $0x8] sm:$0xff]
    %v164 = vld [vmem:[#allocation7 + $0x10] sm:$0xff]
    %v165 = vld [vmem:[#allocation7 + $0x18] sm:$0xff]
    %v166 = vld [vmem:[#allocation7 + $0x20] sm:$0xff]
    %v167 = vld [vmem:[#allocation7 + $0x28] sm:$0xff]
    %v168 = vld [vmem:[#allocation7 + $0x30] sm:$0xff]
    %v169 = vld [vmem:[#allocation7 + $0x38] sm:$0xff]
    %v170 = vld [vmem:[#allocation7 + $0x40] sm:$0xff]
    %v171 = vld [vmem:[#allocation7 + $0x48] sm:$0xff]
    %v172 = vld [vmem:[#allocation7 + $0x50] sm:$0xff]
    %v173 = vld [vmem:[#allocation7 + $0x58] sm:$0xff]
    %v174 = vld [vmem:[#allocation7 + $0x60] sm:$0xff]
    %v175 = vld [vmem:[#allocation7 + $0x68] sm:$0xff]
    %v176 = vld [vmem:[#allocation7 + $0x70] sm:$0xff]
    %v177 = vld [vmem:[#allocation7 + $0x78] sm:$0xff]
    %178 = vmatprep.subr.mxu0 0.0
    %179 = vmatpush1.msra.mxu0 %v177
    %180 = vmatprep.subr.mxu0 0.0
    %181 = vmatpush1.msra.mxu0 %v176
    %182 = vmatprep.subr.mxu0 0.0
    %183 = vmatpush1.msra.mxu0 %v175
    %184 = vmatprep.subr.mxu0 0.0
    %185 = vmatpush1.msra.mxu0 %v174
    %186 = vmatprep.subr.mxu0 0.0
    %187 = vmatpush1.msra.mxu0 %v173
    %188 = vmatprep.subr.mxu0 0.0
    %189 = vmatpush1.msra.mxu0 %v172
    %190 = vmatprep.subr.mxu0 0.0
    %191 = vmatpush1.msra.mxu0 %v171
    %192 = vmatprep.subr.mxu0 0.0
    %193 = vmatpush1.msra.mxu0 %v170
    %194 = vmatprep.subr.mxu0 0.0
    %195 = vmatpush1.msra.mxu0 %v169
    %196 = vmatprep.subr.mxu0 0.0
    %197 = vmatpush1.msra.mxu0 %v168
    %198 = vmatprep.subr.mxu0 0.0
    %199 = vmatpush1.msra.mxu0 %v167
    %200 = vmatprep.subr.mxu0 0.0
    %201 = vmatpush1.msra.mxu0 %v166
    %202 = vmatprep.subr.mxu0 0.0
    %203 = vmatpush1.msra.mxu0 %v165
    %204 = vmatprep.subr.mxu0 0.0
    %205 = vmatpush1.msra.mxu0 %v164
    %206 = vmatprep.subr.mxu0 0.0
    %207 = vmatpush1.msra.mxu0 %v163
    %208 = vmatprep.subr.mxu0 0.0
    %209 = vmatpush1.msra.mxu0 %v162
    %210 = vmatprep.subr.mxu0 0.0
    %211 = vmatpush2.msra.mxu0 0.0
    %212 = vmatprep.subr.mxu0 0.0
    %213 = vmatpush2.msra.mxu0 0.0
    %214 = vmatprep.subr.mxu0 0.0
    %215 = vmatpush2.msra.mxu0 0.0
    %216 = vmatprep.subr.mxu0 0.0
    %217 = vmatpush2.msra.mxu0 0.0
    %218 = vmatprep.subr.mxu0 0.0
    %219 = vmatpush2.msra.mxu0 0.0
    %220 = vmatprep.subr.mxu0 0.0
    %221 = vmatpush2.msra.mxu0 0.0
    %222 = vmatprep.subr.mxu0 0.0
    %223 = vmatpush2.msra.mxu0 0.0
    %224 = vmatprep.subr.mxu0 0.0
    %225 = vmatpush2.msra.mxu0 0.0
    %226 = vmatprep.subr.mxu0 0.0
    %227 = vmatpush2.msra.mxu0 0.0
    %228 = vmatprep.subr.mxu0 0.0
    %229 = vmatpush2.msra.mxu0 0.0
    %230 = vmatprep.subr.mxu0 0.0
    %231 = vmatpush2.msra.mxu0 0.0
    %232 = vmatprep.subr.mxu0 0.0
    %233 = vmatpush2.msra.mxu0 0.0
    %234 = vmatprep.subr.mxu0 0.0
    %235 = vmatpush2.msra.mxu0 0.0
    %236 = vmatprep.subr.mxu0 0.0
    %237 = vmatpush2.msra.mxu0 0.0
    %238 = vmatprep.subr.mxu0 0.0
    %239 = vmatpush2.msra.mxu0 0.0
    %240 = vmatprep.subr.mxu0 0.0
    %241 = vmatpush2.msra.mxu0 0.0
    %242 = vmatprep.mubr.f32.mxu0 0.0
    %243 = vmatmul.mubr.f32.gmra.mxu0 %v158
    %v244 = vpop.f32.mrf.mxu0
    %v245 = vadd.f32 0.0, %v244
    %v246 = vpop.f32.mrf.mxu0
    %247 = vdwg.mxu0
    %s248 = scalar_lea.vmem [#allocation11], 8
    %249 = vst [vmem:[%s248] sm:$0xff] %v245
    %s250 = scalar_lea.vmem [#allocation7], 128
    %v251 = vld [vmem:[%s250] sm:$0xff]
    %v252 = vld [vmem:[%s250 + $0x8] sm:$0xff]
    %v253 = vld [vmem:[%s250 + $0x10] sm:$0xff]
    %v254 = vld [vmem:[%s250 + $0x18] sm:$0xff]
    %v255 = vld [vmem:[%s250 + $0x20] sm:$0xff]
    %v256 = vld [vmem:[%s250 + $0x28] sm:$0xff]
    %v257 = vld [vmem:[%s250 + $0x30] sm:$0xff]
    %v258 = vld [vmem:[%s250 + $0x38] sm:$0xff]
    %v259 = vld [vmem:[%s250 + $0x40] sm:$0xff]
    %v260 = vld [vmem:[%s250 + $0x48] sm:$0xff]
    %v261 = vld [vmem:[%s250 + $0x50] sm:$0xff]
    %v262 = vld [vmem:[%s250 + $0x58] sm:$0xff]
    %v263 = vld [vmem:[%s250 + $0x60] sm:$0xff]
    %v264 = vld [vmem:[%s250 + $0x68] sm:$0xff]
    %v265 = vld [vmem:[%s250 + $0x70] sm:$0xff]
    %v266 = vld [vmem:[%s250 + $0x78] sm:$0xff]
    %267 = vmatprep.subr.mxu0 0.0
    %268 = vmatpush1.msra.mxu0 %v266
    %269 = vmatprep.subr.mxu0 0.0
    %270 = vmatpush1.msra.mxu0 %v265
    %271 = vmatprep.subr.mxu0 0.0
    %272 = vmatpush1.msra.mxu0 %v264
    %273 = vmatprep.subr.mxu0 0.0
    %274 = vmatpush1.msra.mxu0 %v263
    %275 = vmatprep.subr.mxu0 0.0
    %276 = vmatpush1.msra.mxu0 %v262
    %277 = vmatprep.subr.mxu0 0.0
    %278 = vmatpush1.msra.mxu0 %v261
    %279 = vmatprep.subr.mxu0 0.0
    %280 = vmatpush1.msra.mxu0 %v260
    %281 = vmatprep.subr.mxu0 0.0
    %282 = vmatpush1.msra.mxu0 %v259
    %283 = vmatprep.subr.mxu0 0.0
    %284 = vmatpush1.msra.mxu0 %v258
    %285 = vmatprep.subr.mxu0 0.0
    %286 = vmatpush1.msra.mxu0 %v257
    %287 = vmatprep.subr.mxu0 0.0
    %288 = vmatpush1.msra.mxu0 %v256
    %289 = vmatprep.subr.mxu0 0.0
    %290 = vmatpush1.msra.mxu0 %v255
    %291 = vmatprep.subr.mxu0 0.0
    %292 = vmatpush1.msra.mxu0 %v254
    %293 = vmatprep.subr.mxu0 0.0
    %294 = vmatpush1.msra.mxu0 %v253
    %295 = vmatprep.subr.mxu0 0.0
    %296 = vmatpush1.msra.mxu0 %v252
    %297 = vmatprep.subr.mxu0 0.0
    %298 = vmatpush1.msra.mxu0 %v251
    %299 = vmatprep.subr.mxu0 0.0
    %300 = vmatpush2.msra.mxu0 0.0
    %301 = vmatprep.subr.mxu0 0.0
    %302 = vmatpush2.msra.mxu0 0.0
    %303 = vmatprep.subr.mxu0 0.0
    %304 = vmatpush2.msra.mxu0 0.0
    %305 = vmatprep.subr.mxu0 0.0
    %306 = vmatpush2.msra.mxu0 0.0
    %307 = vmatprep.subr.mxu0 0.0
    %308 = vmatpush2.msra.mxu0 0.0
    %309 = vmatprep.subr.mxu0 0.0
    %310 = vmatpush2.msra.mxu0 0.0
    %311 = vmatprep.subr.mxu0 0.0
    %312 = vmatpush2.msra.mxu0 0.0
    %313 = vmatprep.subr.mxu0 0.0
    %314 = vmatpush2.msra.mxu0 0.0
    %315 = vmatprep.subr.mxu0 0.0
    %316 = vmatpush2.msra.mxu0 0.0
    %317 = vmatprep.subr.mxu0 0.0
    %318 = vmatpush2.msra.mxu0 0.0
    %319 = vmatprep.subr.mxu0 0.0
    %320 = vmatpush2.msra.mxu0 0.0
    %321 = vmatprep.subr.mxu0 0.0
    %322 = vmatpush2.msra.mxu0 0.0
    %323 = vmatprep.subr.mxu0 0.0
    %324 = vmatpush2.msra.mxu0 0.0
    %325 = vmatprep.subr.mxu0 0.0
    %326 = vmatpush2.msra.mxu0 0.0
    %327 = vmatprep.subr.mxu0 0.0
    %328 = vmatpush2.msra.mxu0 0.0
    %329 = vmatprep.subr.mxu0 0.0
    %330 = vmatpush2.msra.mxu0 0.0
    %331 = vmatprep.mubr.f32.mxu0 0.0
    %332 = vmatmul.mubr.f32.gmra.mxu0 %v245
    %v333 = vpop.f32.mrf.mxu0
    %v334 = vadd.f32 0.0, %v333
    %v335 = vpop.f32.mrf.mxu0
    %336 = vdwg.mxu0
    %s337 = scalar_lea.vmem [#allocation11], 16
    %338 = vst [vmem:[%s337] sm:$0xff] %v334
    %v339 = vld [vmem:[#allocation8] sm:$0xff]
    %v340 = vld [vmem:[#allocation8 + $0x8] sm:$0xff]
    %v341 = vld [vmem:[#allocation8 + $0x10] sm:$0xff]
    %v342 = vld [vmem:[#allocation8 + $0x18] sm:$0xff]
    %v343 = vld [vmem:[#allocation8 + $0x20] sm:$0xff]
    %v344 = vld [vmem:[#allocation8 + $0x28] sm:$0xff]
    %v345 = vld [vmem:[#allocation8 + $0x30] sm:$0xff]
    %v346 = vld [vmem:[#allocation8 + $0x38] sm:$0xff]
    %v347 = vld [vmem:[#allocation8 + $0x40] sm:$0xff]
    %v348 = vld [vmem:[#allocation8 + $0x48] sm:$0xff]
    %v349 = vld [vmem:[#allocation8 + $0x50] sm:$0xff]
    %v350 = vld [vmem:[#allocation8 + $0x58] sm:$0xff]
    %v351 = vld [vmem:[#allocation8 + $0x60] sm:$0xff]
    %v352 = vld [vmem:[#allocation8 + $0x68] sm:$0xff]
    %v353 = vld [vmem:[#allocation8 + $0x70] sm:$0xff]
    %v354 = vld [vmem:[#allocation8 + $0x78] sm:$0xff]
    %355 = vmatprep.subr.mxu0 0.0
    %356 = vmatpush1.msra.mxu0 %v354
    %357 = vmatprep.subr.mxu0 0.0
    %358 = vmatpush1.msra.mxu0 %v353
    %359 = vmatprep.subr.mxu0 0.0
    %360 = vmatpush1.msra.mxu0 %v352
    %361 = vmatprep.subr.mxu0 0.0
    %362 = vmatpush1.msra.mxu0 %v351
    %363 = vmatprep.subr.mxu0 0.0
    %364 = vmatpush1.msra.mxu0 %v350
    %365 = vmatprep.subr.mxu0 0.0
    %366 = vmatpush1.msra.mxu0 %v349
    %367 = vmatprep.subr.mxu0 0.0
    %368 = vmatpush1.msra.mxu0 %v348
    %369 = vmatprep.subr.mxu0 0.0
    %370 = vmatpush1.msra.mxu0 %v347
    %371 = vmatprep.subr.mxu0 0.0
    %372 = vmatpush1.msra.mxu0 %v346
    %373 = vmatprep.subr.mxu0 0.0
    %374 = vmatpush1.msra.mxu0 %v345
    %375 = vmatprep.subr.mxu0 0.0
    %376 = vmatpush1.msra.mxu0 %v344
    %377 = vmatprep.subr.mxu0 0.0
    %378 = vmatpush1.msra.mxu0 %v343
    %379 = vmatprep.subr.mxu0 0.0
    %380 = vmatpush1.msra.mxu0 %v342
    %381 = vmatprep.subr.mxu0 0.0
    %382 = vmatpush1.msra.mxu0 %v341
    %383 = vmatprep.subr.mxu0 0.0
    %384 = vmatpush1.msra.mxu0 %v340
    %385 = vmatprep.subr.mxu0 0.0
    %386 = vmatpush1.msra.mxu0 %v339
    %387 = vmatprep.subr.mxu0 0.0
    %388 = vmatpush2.msra.mxu0 0.0
    %389 = vmatprep.subr.mxu0 0.0
    %390 = vmatpush2.msra.mxu0 0.0
    %391 = vmatprep.subr.mxu0 0.0
    %392 = vmatpush2.msra.mxu0 0.0
    %393 = vmatprep.subr.mxu0 0.0
    %394 = vmatpush2.msra.mxu0 0.0
    %395 = vmatprep.subr.mxu0 0.0
    %396 = vmatpush2.msra.mxu0 0.0
    %397 = vmatprep.subr.mxu0 0.0
    %398 = vmatpush2.msra.mxu0 0.0
    %399 = vmatprep.subr.mxu0 0.0
    %400 = vmatpush2.msra.mxu0 0.0
    %401 = vmatprep.subr.mxu0 0.0
    %402 = vmatpush2.msra.mxu0 0.0
    %403 = vmatprep.subr.mxu0 0.0
    %404 = vmatpush2.msra.mxu0 0.0
    %405 = vmatprep.subr.mxu0 0.0
    %406 = vmatpush2.msra.mxu0 0.0
    %407 = vmatprep.subr.mxu0 0.0
    %408 = vmatpush2.msra.mxu0 0.0
    %409 = vmatprep.subr.mxu0 0.0
    %410 = vmatpush2.msra.mxu0 0.0
    %411 = vmatprep.subr.mxu0 0.0
    %412 = vmatpush2.msra.mxu0 0.0
    %413 = vmatprep.subr.mxu0 0.0
    %414 = vmatpush2.msra.mxu0 0.0
    %415 = vmatprep.subr.mxu0 0.0
    %416 = vmatpush2.msra.mxu0 0.0
    %417 = vmatprep.subr.mxu0 0.0
    %418 = vmatpush2.msra.mxu0 0.0
    %419 = vmatprep.mubr.f32.mxu0 0.0
    %420 = vmatmul.mubr.f32.gmra.mxu0 %v334
    %v421 = vpop.f32.mrf.mxu0
    %v422 = vadd.f32 0.0, %v421
    %v423 = vpop.f32.mrf.mxu0
    %424 = vdwg.mxu0
    %425 = vst [vmem:[#allocation10] sm:$0xff] %v422
    // Predicated region
    $region34: #{tpu_custom_call.1} parent=1 // pred_check
      _
    $region35: #{tpu_custom_call.1} parent=1 // pred_check_branch
      %427 = sbr.rel (0) target = $region37
    $region36: #{tpu_custom_call.1} parent=1 // pred_region
      %s429 = ssub.s32 128, 128
      %430 = vsyncadd [#allocation4], %s429
      %s432 = sshll.u32 [#allocation10], 4
      %s433 = int_to_ptr.vmem [resolvable:$true] %s432
      %435 = dma.vmem_to_hbm [thread:$0]  %s433, 128, %s4, [#allocation4]
    $region37: #{tpu_custom_call.1} parent=1 // pred_fallthru
      _
    // Predicated region
    $region38: #{tpu_custom_call.1} parent=1 // pred_check
      _
    $region39: #{tpu_custom_call.1} parent=1 // pred_check_branch
      %437 = sbr.rel (0) target = $region41
    $region40: #{tpu_custom_call.1} parent=1 // pred_region
      %s439 = ssub.s32 384, 384
      %440 = vsyncadd [#allocation12], %s439
      %s441 = sshll.u32 [#allocation11], 4
      %s442 = int_to_ptr.vmem [resolvable:$true] %s441
      %447 = dma.vmem_to_hbm [thread:$0]  %s442, 384, %s5, [#allocation12], 128, 128, 8
    $region41: #{tpu_custom_call.1} parent=1 // pred_fallthru
      _
    // Predicated region
    $region42: #{tpu_custom_call.1} parent=1 // pred_check
      _
    $region43: #{tpu_custom_call.1} parent=1 // pred_check_branch
      %449 = sbr.rel (0) target = $region45
    $region44: #{tpu_custom_call.1} parent=1 // pred_region
      %450 = dma.done [#allocation4], 128
    $region45: #{tpu_custom_call.1} parent=1 // pred_fallthru
      _
    // Predicated region
    $region46: #{tpu_custom_call.1} parent=1 // pred_check
      _
    $region47: #{tpu_custom_call.1} parent=1 // pred_check_branch
      %452 = sbr.rel (0) target = $region49
    $region48: #{tpu_custom_call.1} parent=1 // pred_region
      %453 = dma.done [#allocation12], 384
    $region49: #{tpu_custom_call.1} parent=1 // pred_fallthru
      _
    %454 = vsyncpa [#allocation3], 1
    %455 = vsyncpa [#allocation6], 1
    %456 = vsyncpa [#allocation9], 1
    %457 = vsyncpa [#allocation4], 1
    %458 = vsyncpa [#allocation12], 1

</llo_original>
